<compile_context>
chip_gen: v5e
topology: v5e:2x2
jax: 0.10.0
libtpu: 0.0.40
codegen_flags: <defaults>
</compile_context>

<pallas_src>
import functools

import jax
import jax.numpy as jnp
from jax import lax
from jax.experimental import pallas as pl
from jax.experimental.pallas import tpu as pltpu


def _mix_uint32(x):
    """'lowbias32' integer mixer: good avalanche for counter-based dropout masks."""
    x = x ^ (x >> 16)
    x = x * jnp.uint32(0x7FEB352D)
    x = x ^ (x >> 15)
    x = x * jnp.uint32(0x846CA68B)
    x = x ^ (x >> 16)
    return x


def _transformer_embedding_kernel(
    ids_ref,        # SMEM scalar-prefetch: (B, S_pad) int32 token ids
    seed_ref,       # SMEM scalar-prefetch: (1,)  int32 dropout seed
    emb_ref,        # VMEM (V, D) resident table  OR  ANY/HBM (V, D) table
    pos_ref,        # VMEM (TS, D) positional-encoding chunk (float32)
    out_ref,        # VMEM (TS, D) output tile (batch dim squeezed)
    gather_ref,     # VMEM scratch: (TS, D) [resident path] or (2, TS, D) [HBM path]
    dma_sem=None,   # DMA semaphores (2,) [HBM path only]
    *,
    ts: int,
    d_model: int,
    batch: int,
    seq_len: int,
    drop_prob: float,
    training: bool,
    table_resident: bool,
    use_hw_prng: bool,
):
    c = pl.program_id(0)          # sequence chunk (outer, "parallel")
    b = pl.program_id(1)          # batch element  (inner, "arbitrary")
    base = c * ts                 # first token of this chunk

    # Training with drop_prob >= 1: output is identically zero -> skip the gather.
    if training and drop_prob >= 1.0:
        out_ref[...] = jnp.zeros_like(out_ref)
        return

    issue_unroll = True if ts <= 64 else 8

    if table_resident:
        # ---- fast path: table resident in VMEM, rows gathered with vector loads --
        if ts <= 128:
            # Fully static store indices (unrolled at trace time).
            for i in range(ts):
                tok = ids_ref[b, base + i]
                gather_ref[pl.ds(i, 1), :] = emb_ref[pl.ds(tok, 1), :]
        else:
            def gather_row(i, carry):
                tok = ids_ref[b, base + i]
                gather_ref[pl.ds(i, 1), :] = emb_ref[pl.ds(tok, 1), :]
                return carry
            lax.fori_loop(0, ts, gather_row, 0, unroll=8)
        gathered = gather_ref[...]
    else:
        # ---- HBM path: ids-driven row gather, double-buffered over the batch axis -
        def issue_rows(b_src, slot_dst):
            def body(i, carry):
                tok = ids_ref[b_src, base + i]
                pltpu.make_async_copy(
                    emb_ref.at[pl.ds(tok, 1), :],
                    gather_ref.at[slot_dst, pl.ds(i, 1), :],
                    dma_sem.at[slot_dst],
                ).start()
                return carry
            lax.fori_loop(0, ts, body, 0, unroll=issue_unroll)

        slot = b % 2

        # Prologue: the first batch element of this chunk fetches its own rows.
        @pl.when(b == 0)
        def _():
            issue_rows(b, slot)

        # One aggregate wait: only the semaphore and the destination byte count
        # matter; (TS, D) bytes == the sum of the TS single-row copies issued on
        # dma_sem[slot] (DMA semaphores are byte-counted).
        pltpu.make_async_copy(
            gather_ref.at[slot], gather_ref.at[slot], dma_sem.at[slot]
        ).wait()

        # Prefetch the next batch element's rows into the other slot while we
        # compute on this one (ids are already fully resident in SMEM).
        if batch > 1:
            @pl.when(b + 1 < batch)
            def _():
                issue_rows(b + 1, 1 - slot)

        gathered = gather_ref[slot]

    # ---- fused positional add (+ inverted dropout), single dense (TS, D) store ---
    vals = gathered.astype(jnp.float32) + pos_ref[...]

    if training and drop_prob > 0.0:
        thresh24 = int(round(float(drop_prob) * (1 << 24)))   # integer threshold
        inv_keep = 1.0 / (1.0 - float(drop_prob))              # hoisted constant

        if use_hw_prng:
            # Seed with (user_seed, b, c) as separate words: distinct stream per
            # tile with no overlap between nearby user seeds.
            pltpu.prng_seed(seed_ref[0], b, c)
            bits = pltpu.prng_random_bits((ts, d_model))
            bits24 = bits & jnp.asarray(0x00FFFFFF, dtype=bits.dtype)
            keep = bits24 >= jnp.asarray(thresh24, dtype=bits.dtype)
        else:
            # Portable counter-hash fallback (e.g. CPU interpret mode).
            row = lax.broadcasted_iota(jnp.uint32, (ts, d_model), 0)
            col = lax.broadcasted_iota(jnp.uint32, (ts, d_model), 1)
            offs = (b * seq_len + base).astype(jnp.uint32)
            flat = (offs + row) * jnp.uint32(d_model) + col
            seed_mix = _mix_uint32(
                seed_ref[0].astype(jnp.uint32) ^ jnp.uint32(0x9E3779B9))
            bits24 = _mix_uint32(flat ^ seed_mix) & jnp.uint32(0x00FFFFFF)
            keep = bits24 >= jnp.uint32(thresh24)

        vals = jnp.where(keep, vals * inv_keep, 0.0)

    out_ref[...] = vals.astype(out_ref.dtype)


def _pick_chunk(seq_len_pad: int, d_model: int, tile_budget_bytes: int = 2 << 20) -> int:
    """Largest row count in {1024..8} that divides the (8-padded) sequence length
    and keeps a (ts, D) f32 tile under the byte budget (VMEM-safe on v7x)."""
    max_rows = max(8, tile_budget_bytes // max(1, d_model * 4))
    for cand in (1024, 512, 256, 128, 64, 32, 16, 8):
        if cand <= seq_len_pad and cand <= max_rows and seq_len_pad % cand == 0:
            return cand
    return 8  # unreachable: seq_len_pad is always a multiple of 8


def transformer_embedding(ids, emb_table, pos_enc, seed, *,
                          drop_prob=0.1, training=True,
                          use_hw_prng=None, table_in_vmem=None):
    """Pallas TransformerEmbedding.forward: dropout(token_embedding[ids] + pos_enc[:S])."""
    B, S = ids.shape
    V, D = emb_table.shape
    dtype = emb_table.dtype

    if use_hw_prng is None:
        # HW PRNG only lowers on real TPU; elsewhere use the portable hash.
        use_hw_prng = jax.default_backend() == "tpu"

    table_bytes = V * D * dtype.itemsize
    if table_in_vmem is None:
        # Conservative gate: table fits alongside the pipeline tiles even on v7x
        # (64 MiB physical VMEM); v5e/v6e (128 MiB) trivially satisfy it too.
        table_in_vmem = table_bytes <= (16 << 20)

    # Pad the sequence to a multiple of 8 so tiles obey the (8, 128) constraint
    # without ever falling back to a full-(S, D) tile.
    S_pad = ((S + 7) // 8) * 8
    ts = _pick_chunk(S_pad, D)
    num_chunks = S_pad // ts

    ids_p = ids.astype(jnp.int32)
    pos = pos_enc[:S].astype(jnp.float32)     # PositionalEmbedding.forward -> encoding[:S]
    if S_pad != S:
        ids_p = jnp.pad(ids_p, ((0, 0), (0, S_pad - S)))   # pad token id 0 (valid row)
        pos = jnp.pad(pos, ((0, S_pad - S), (0, 0)))

    # TODO(synk): for very large B*S, stream ids through a per-chunk SMEM BlockSpec
    # instead of prefetching the whole (B, S) id matrix into SMEM.

    if table_in_vmem:
        table_spec = pl.BlockSpec((V, D), lambda c, b, ids_r, seed_r: (0, 0))
        scratch_shapes = [pltpu.VMEM((ts, D), dtype)]
    else:
        table_spec = pl.BlockSpec(memory_space=pl.ANY)      # table stays in HBM
        scratch_shapes = [pltpu.VMEM((2, ts, D), dtype),     # double-buffered gather
                          pltpu.SemaphoreType.DMA((2,))]

    tile_f32 = ts * D * 4
    gather_bytes = (1 if table_in_vmem else 2) * ts * D * dtype.itemsize
    vmem_need = 4 * tile_f32 + gather_bytes + (table_bytes if table_in_vmem else 0)
    vmem_limit = int(min(max(2 * vmem_need, 32 << 20), 64 << 20))

    kernel = functools.partial(
        _transformer_embedding_kernel,
        ts=ts, d_model=D, batch=B, seq_len=S_pad,
        drop_prob=float(drop_prob), training=bool(training),
        table_resident=bool(table_in_vmem), use_hw_prng=bool(use_hw_prng))

    out = pl.pallas_call(
        kernel,
        out_shape=jax.ShapeDtypeStruct((B, S_pad, D), dtype),
        grid_spec=pltpu.PrefetchScalarGridSpec(
            num_scalar_prefetch=2,                 # ids, seed -> SMEM
            grid=(num_chunks, B),                  # batch innermost: pos block reused
            in_specs=[
                table_spec,
                pl.BlockSpec((ts, D), lambda c, b, ids_r, seed_r: (c, 0)),
            ],
            out_specs=pl.BlockSpec(
                (None, ts, D), lambda c, b, ids_r, seed_r: (b, c, 0)),
            scratch_shapes=scratch_shapes,
        ),
        compiler_params=pltpu.CompilerParams(
            # Chunk axis may split across TensorCores; the batch axis stays
            # sequential per core, so cross-step double-buffering is safe.
            dimension_semantics=("parallel", "arbitrary"),
            vmem_limit_bytes=vmem_limit,
        ),
    )(ids_p, jnp.asarray([seed], dtype=jnp.int32), emb_table, pos)

    if S_pad != S:
        out = out[:, :S, :]
    return out


def build_positional_encoding(max_len, d_model):
    """Sinusoidal table as in PositionalEmbedding.__init__ (with the arange typo fixed)."""
    pos = jnp.arange(max_len, dtype=jnp.float32)[:, None]
    _2i = jnp.arange(0, d_model, 2, dtype=jnp.float32)
    angle = pos / jnp.power(10000.0, _2i / float(d_model))
    enc = jnp.zeros((max_len, d_model), dtype=jnp.float32)
    enc = enc.at[:, 0::2].set(jnp.sin(angle))
    enc = enc.at[:, 1::2].set(jnp.cos(angle))
    return enc


def build_token_embedding(key, vocab_size, d_model, padding_idx=1):
    """nn.Embedding(vocab_size, d_model, padding_idx=1): N(0,1) init, padding row zeroed."""
    w = jax.random.normal(key, (vocab_size, d_model), dtype=jnp.float32)
    w = w.at[padding_idx].set(0.0)
    return w


if __name__ == "__main__":
    vocab_size = 64
    d_model = 128
    max_len = 16
    drop_prob = 0.1
    batch = 2
    seq_len = 8

    root = jax.random.PRNGKey(0)
    k_emb, k_ids = jax.random.split(root)

    emb_table = build_token_embedding(k_emb, vocab_size, d_model, padding_idx=1)
    pos_enc = build_positional_encoding(max_len, d_model)
    ids = jax.random.randint(k_ids, (batch, seq_len), 0, vocab_size, dtype=jnp.int32)

    ref = emb_table[ids] + pos_enc[:seq_len][None, :, :]

    # 1) Eval mode, VMEM-resident-table fast path (auto-selected for this vocab).
    out_eval = transformer_embedding(ids, emb_table, pos_enc, seed=0,
                                     drop_prob=drop_prob, training=False)
    out_eval = jax.block_until_ready(out_eval)
    assert out_eval.shape == (batch, seq_len, d_model)
    assert out_eval.dtype == jnp.float32
    assert jnp.allclose(out_eval, ref, atol=1e-5, rtol=1e-5), "eval (VMEM table) mismatch"

    # 2) Eval mode, HBM DMA-gather path (forced): exercises the double-buffered
    #    gather + aggregate wait.
    out_eval_hbm = transformer_embedding(ids, emb_table, pos_enc, seed=0,
                                         drop_prob=drop_prob, training=False,
                                         table_in_vmem=False)
    out_eval_hbm = jax.block_until_ready(out_eval_hbm)
    assert jnp.allclose(out_eval_hbm, ref, atol=1e-5, rtol=1e-5), "eval (HBM gather) mismatch"

    # 3) Eval mode with a sequence length that is not a multiple of 8 (padding path).
    s_odd = 6
    out_odd = transformer_embedding(ids[:, :s_odd], emb_table, pos_enc, seed=0,
                                    drop_prob=drop_prob, training=False)
    out_odd = jax.block_until_ready(out_odd)
    assert out_odd.shape == (batch, s_odd, d_model)
    assert jnp.allclose(out_odd, ref[:, :s_odd], atol=1e-5, rtol=1e-5), "padded-seq mismatch"

    # 4) Training: every element is either dropped (0) or scaled by 1/(1-p).
    out_train = transformer_embedding(ids, emb_table, pos_enc, seed=1234,
                                      drop_prob=drop_prob, training=True)
    out_train = jax.block_until_ready(out_train)
    assert out_train.shape == (batch, seq_len, d_model)
    scaled = ref / (1.0 - drop_prob)
    ok = (out_train == 0.0) | (jnp.abs(out_train - scaled) < 1e-4)
    assert bool(jnp.all(ok)), "training-mode values are neither dropped nor scaled"
    drop_frac = float(jnp.mean((out_train == 0.0).astype(jnp.float32)))
    assert 0.02 <= drop_frac <= 0.30, f"implausible dropout fraction {drop_frac}"

    print("KERNEL_OK")
</pallas_src>

<mosaic_0001>
module attributes {stable_mosaic.version = 11 : i64} {
  func.func @_transformer_embedding_kernel(%arg0: i32, %arg1: i32, %arg2: memref<2x8xi32, #tpu.memory_space<smem>>, %arg3: memref<1xi32, #tpu.memory_space<smem>>, %arg4: memref<64x128xf32, #tpu.memory_space<vmem>>, %arg5: memref<8x128xf32, #tpu.memory_space<vmem>>, %arg6: memref<1x8x128xf32, #tpu.memory_space<vmem>>, %arg7: memref<8x128xf32, #tpu.memory_space<vmem>>) attributes {dimension_semantics = [#tpu.dimension_semantics<parallel>, #tpu.dimension_semantics<arbitrary>], iteration_bounds = array<i64: 1, 2>, scalar_prefetch = 2 : i64, scratch_operands = 1 : i64, tpu.core_type = #tpu.core_type<tc>, window_params = [{pipeline_mode = #tpu.pipeline_mode<synchronous>, transform_indices = @transform_0, window_bounds = array<i64: 64, 128>}, {transform_indices = @transform_1, window_bounds = array<i64: 8, 128>}, {transform_indices = @transform_2, window_bounds = array<i64: 1, 8, 128>}]} {
    %c8_i32 = arith.constant 8 : i32
    %0 = arith.muli %arg0, %c8_i32 : i32
    %c0_i32 = arith.constant 0 : i32
    %1 = arith.addi %0, %c0_i32 : i32
    %2 = arith.index_cast %arg1 : i32 to index
    %3 = arith.index_cast %1 : i32 to index
    %4 = memref.load %arg2[%2, %3] : memref<2x8xi32, #tpu.memory_space<smem>>
    %5 = arith.index_cast %4 : i32 to index
    %c0 = arith.constant 0 : index
    %6 = vector.load %arg4[%5, %c0] : memref<64x128xf32, #tpu.memory_space<vmem>>, vector<1x128xf32>
    %c0_0 = arith.constant 0 : index
    %c0_1 = arith.constant 0 : index
    %7 = vector.load %arg7[%c0_0, %c0_1] : memref<8x128xf32, #tpu.memory_space<vmem>>, vector<1x128xf32>
    tpu.vector_store %arg7[%c0_0, %c0_1], %6 {strides = array<i32>} : memref<8x128xf32, #tpu.memory_space<vmem>>, vector<1x128xf32>,
    %c1_i32 = arith.constant 1 : i32
    %8 = arith.addi %0, %c1_i32 : i32
    %9 = arith.index_cast %arg1 : i32 to index
    %10 = arith.index_cast %8 : i32 to index
    %11 = memref.load %arg2[%9, %10] : memref<2x8xi32, #tpu.memory_space<smem>>
    %12 = arith.index_cast %11 : i32 to index
    %c0_2 = arith.constant 0 : index
    %13 = vector.load %arg4[%12, %c0_2] : memref<64x128xf32, #tpu.memory_space<vmem>>, vector<1x128xf32>
    %c1 = arith.constant 1 : index
    %c0_3 = arith.constant 0 : index
    %14 = vector.load %arg7[%c1, %c0_3] : memref<8x128xf32, #tpu.memory_space<vmem>>, vector<1x128xf32>
    tpu.vector_store %arg7[%c1, %c0_3], %13 {strides = array<i32>} : memref<8x128xf32, #tpu.memory_space<vmem>>, vector<1x128xf32>,
    %c2_i32 = arith.constant 2 : i32
    %15 = arith.addi %0, %c2_i32 : i32
    %16 = arith.index_cast %arg1 : i32 to index
    %17 = arith.index_cast %15 : i32 to index
    %18 = memref.load %arg2[%16, %17] : memref<2x8xi32, #tpu.memory_space<smem>>
    %19 = arith.index_cast %18 : i32 to index
    %c0_4 = arith.constant 0 : index
    %20 = vector.load %arg4[%19, %c0_4] : memref<64x128xf32, #tpu.memory_space<vmem>>, vector<1x128xf32>
    %c2 = arith.constant 2 : index
    %c0_5 = arith.constant 0 : index
    %21 = vector.load %arg7[%c2, %c0_5] : memref<8x128xf32, #tpu.memory_space<vmem>>, vector<1x128xf32>
    tpu.vector_store %arg7[%c2, %c0_5], %20 {strides = array<i32>} : memref<8x128xf32, #tpu.memory_space<vmem>>, vector<1x128xf32>,
    %c3_i32 = arith.constant 3 : i32
    %22 = arith.addi %0, %c3_i32 : i32
    %23 = arith.index_cast %arg1 : i32 to index
    %24 = arith.index_cast %22 : i32 to index
    %25 = memref.load %arg2[%23, %24] : memref<2x8xi32, #tpu.memory_space<smem>>
    %26 = arith.index_cast %25 : i32 to index
    %c0_6 = arith.constant 0 : index
    %27 = vector.load %arg4[%26, %c0_6] : memref<64x128xf32, #tpu.memory_space<vmem>>, vector<1x128xf32>
    %c3 = arith.constant 3 : index
    %c0_7 = arith.constant 0 : index
    %28 = vector.load %arg7[%c3, %c0_7] : memref<8x128xf32, #tpu.memory_space<vmem>>, vector<1x128xf32>
    tpu.vector_store %arg7[%c3, %c0_7], %27 {strides = array<i32>} : memref<8x128xf32, #tpu.memory_space<vmem>>, vector<1x128xf32>,
    %c4_i32 = arith.constant 4 : i32
    %29 = arith.addi %0, %c4_i32 : i32
    %30 = arith.index_cast %arg1 : i32 to index
    %31 = arith.index_cast %29 : i32 to index
    %32 = memref.load %arg2[%30, %31] : memref<2x8xi32, #tpu.memory_space<smem>>
    %33 = arith.index_cast %32 : i32 to index
    %c0_8 = arith.constant 0 : index
    %34 = vector.load %arg4[%33, %c0_8] : memref<64x128xf32, #tpu.memory_space<vmem>>, vector<1x128xf32>
    %c4 = arith.constant 4 : index
    %c0_9 = arith.constant 0 : index
    %35 = vector.load %arg7[%c4, %c0_9] : memref<8x128xf32, #tpu.memory_space<vmem>>, vector<1x128xf32>
    tpu.vector_store %arg7[%c4, %c0_9], %34 {strides = array<i32>} : memref<8x128xf32, #tpu.memory_space<vmem>>, vector<1x128xf32>,
    %c5_i32 = arith.constant 5 : i32
    %36 = arith.addi %0, %c5_i32 : i32
    %37 = arith.index_cast %arg1 : i32 to index
    %38 = arith.index_cast %36 : i32 to index
    %39 = memref.load %arg2[%37, %38] : memref<2x8xi32, #tpu.memory_space<smem>>
    %40 = arith.index_cast %39 : i32 to index
    %c0_10 = arith.constant 0 : index
    %41 = vector.load %arg4[%40, %c0_10] : memref<64x128xf32, #tpu.memory_space<vmem>>, vector<1x128xf32>
    %c5 = arith.constant 5 : index
    %c0_11 = arith.constant 0 : index
    %42 = vector.load %arg7[%c5, %c0_11] : memref<8x128xf32, #tpu.memory_space<vmem>>, vector<1x128xf32>
    tpu.vector_store %arg7[%c5, %c0_11], %41 {strides = array<i32>} : memref<8x128xf32, #tpu.memory_space<vmem>>, vector<1x128xf32>,
    %c6_i32 = arith.constant 6 : i32
    %43 = arith.addi %0, %c6_i32 : i32
    %44 = arith.index_cast %arg1 : i32 to index
    %45 = arith.index_cast %43 : i32 to index
    %46 = memref.load %arg2[%44, %45] : memref<2x8xi32, #tpu.memory_space<smem>>
    %47 = arith.index_cast %46 : i32 to index
    %c0_12 = arith.constant 0 : index
    %48 = vector.load %arg4[%47, %c0_12] : memref<64x128xf32, #tpu.memory_space<vmem>>, vector<1x128xf32>
    %c6 = arith.constant 6 : index
    %c0_13 = arith.constant 0 : index
    %49 = vector.load %arg7[%c6, %c0_13] : memref<8x128xf32, #tpu.memory_space<vmem>>, vector<1x128xf32>
    tpu.vector_store %arg7[%c6, %c0_13], %48 {strides = array<i32>} : memref<8x128xf32, #tpu.memory_space<vmem>>, vector<1x128xf32>,
    %c7_i32 = arith.constant 7 : i32
    %50 = arith.addi %0, %c7_i32 : i32
    %51 = arith.index_cast %arg1 : i32 to index
    %52 = arith.index_cast %50 : i32 to index
    %53 = memref.load %arg2[%51, %52] : memref<2x8xi32, #tpu.memory_space<smem>>
    %54 = arith.index_cast %53 : i32 to index
    %c0_14 = arith.constant 0 : index
    %55 = vector.load %arg4[%54, %c0_14] : memref<64x128xf32, #tpu.memory_space<vmem>>, vector<1x128xf32>
    %c7 = arith.constant 7 : index
    %c0_15 = arith.constant 0 : index
    %56 = vector.load %arg7[%c7, %c0_15] : memref<8x128xf32, #tpu.memory_space<vmem>>, vector<1x128xf32>
    tpu.vector_store %arg7[%c7, %c0_15], %55 {strides = array<i32>} : memref<8x128xf32, #tpu.memory_space<vmem>>, vector<1x128xf32>,
    %c0_16 = arith.constant 0 : index
    %c0_17 = arith.constant 0 : index
    %57 = vector.load %arg7[%c0_16, %c0_17] : memref<8x128xf32, #tpu.memory_space<vmem>>, vector<8x128xf32>
    %c0_18 = arith.constant 0 : index
    %c0_19 = arith.constant 0 : index
    %58 = vector.load %arg5[%c0_18, %c0_19] : memref<8x128xf32, #tpu.memory_space<vmem>>, vector<8x128xf32>
    %59 = arith.addf %57, %58 : vector<8x128xf32>
    %c0_20 = arith.constant 0 : index
    %c0_21 = arith.constant 0 : index
    %c0_22 = arith.constant 0 : index
    %60 = vector.load %arg6[%c0_20, %c0_21, %c0_22] : memref<1x8x128xf32, #tpu.memory_space<vmem>>, vector<1x8x128xf32>
    %61 = vector.shape_cast %60 : vector<1x8x128xf32> to vector<8x128xf32>
    %62 = vector.shape_cast %59 : vector<8x128xf32> to vector<1x8x128xf32>
    tpu.vector_store %arg6[%c0_20, %c0_21, %c0_22], %62 {strides = array<i32>} : memref<1x8x128xf32, #tpu.memory_space<vmem>>, vector<1x8x128xf32>,
    return
  }
  func.func @transform_0(%arg0: i32, %arg1: i32, %arg2: memref<2x8xi32, #tpu.memory_space<smem>>, %arg3: memref<1xi32, #tpu.memory_space<smem>>) -> (i32, i32) {
    %c0_i32 = arith.constant 0 : i32
    %c0_i32_0 = arith.constant 0 : i32
    %c0_i32_1 = arith.constant 0 : i32
    return %c0_i32, %c0_i32_0 : i32, i32
  }
  func.func @transform_1(%arg0: i32, %arg1: i32, %arg2: memref<2x8xi32, #tpu.memory_space<smem>>, %arg3: memref<1xi32, #tpu.memory_space<smem>>) -> (i32, i32) {
    %c0_i32 = arith.constant 0 : i32
    %c0_i32_0 = arith.constant 0 : i32
    return %arg0, %c0_i32 : i32, i32
  }
  func.func @transform_2(%arg0: i32, %arg1: i32, %arg2: memref<2x8xi32, #tpu.memory_space<smem>>, %arg3: memref<1xi32, #tpu.memory_space<smem>>) -> (i32, i32, i32) {
    %c0_i32 = arith.constant 0 : i32
    %c0_i32_0 = arith.constant 0 : i32
    return %arg1, %arg0, %c0_i32 : i32, i32, i32
  }
}

</mosaic_0001>

<llo_original>
// kernel: tpu_custom_call.1
$region0: #{tpu_custom_call.1}
  #allocation0 [shape = 'u32[]', space=smem, size = 0x4, offset = 0x4, fixed_abs, tag = 'smem constant byte address 0x4 - core index']
  #allocation1 [shape = 'u32[72,128]{1,0:T(1,128)}', space=vmem, size = 0x9000, scoped, tag = 'internal scratch']
  #allocation2 [shape = 'f32[8,128]{1,0:T(8,128)}', space=vmem, size = 0x1000, scoped, tag = 'scratch operand']
  #allocation3 [shape = 's32[1]{0}', space=sflag, size = 0x4, scoped, tag = 'scoped memory for tpu_custom_call.1']
  #allocation4 [shape = 'u8[1024]{0}', space=smem, size = 0x400, scoped, tag = 'prefetched SMEM operand 0']
  #allocation5 [shape = 's32[1]{0:T(128)S(6)}', space=smem, size = 0x200, scoped, tag = 'prefetched SMEM operand 1']
  %s0 = inlined_call_operand.vmem [shape: s32[2,8], index: 0, kind: input, shape index: {}]
  %s1 = inlined_call_operand.<no memory space> [shape: s32[1], index: 1, kind: input, shape index: {}]
  %s2 = inlined_call_operand.hbm [shape: f32[64,128], index: 2, kind: input, shape index: {}]
  %s3 = inlined_call_operand.hbm [shape: f32[8,128], index: 3, kind: input, shape index: {}]
  %s4 = inlined_call_operand.hbm [shape: f32[2,8,128], index: 4, kind: output, shape index: {}]
  %s5 = sld [smem:[#allocation0]]
  $region49: #{tpu_custom_call.1} parent=0
    _
  %s7 = ssub.s32 1, %s5
  %s8 = scalar_select 0, %s7, %s5
  %s10 = sshll.u32 %s0, 4
  %s11 = int_to_ptr.vmem [resolvable:$true] %s10
  %13 = dma.vmem_to_smem %s11, 32, [#allocation4], [#allocation3]
  %14 = sst [smem:[#allocation5]] %s1
  %16 = dma.done [#allocation3], 32
  %17 = sfence
  $region1: #{tpu_custom_call.1} parent=0
    #allocation6 [shape = 'u8[32768]{0}', space=vmem, size = 0x8000, scoped, tag = 'input window, operand 2, single buffered']
    #allocation7 [shape = 's32[2]{0}', space=sflag, size = 0x8, scoped, tag = 'scoped memory for tpu_custom_call.1']
    #allocation8 [shape = 's32[2]{0}', space=sflag, size = 0x8, scoped, tag = 'scoped memory for tpu_custom_call.1']
    #allocation9 [shape = 'u8[4096]{0}', space=vmem, size = 0x1000, scoped, tag = 'input window, operand 3, single buffered']
    #allocation10 [shape = 's32[1]{0}', space=sflag, size = 0x4, scoped, tag = 'scoped memory for tpu_custom_call.1']
    #allocation11 [shape = 'u8[8192]{0}', space=vmem, size = 0x2000, scoped, tag = 'output window, operand 0']
    %18 = vsyncpa [#allocation7], 0
    %19 = vsyncpa [#allocation10], 0
    %20 = vsyncpa [#allocation8], 0
    %s21 = scalar_lea.sflag [#allocation8], 1
    %22 = vsyncpa %s21, 0
    loop: start=0, step=1, limit=4
    $region2: #{tpu_custom_call.1} parent=1 // loop_pre_header
      _
    $region3: #{tpu_custom_call.1} parent=1 // loop_header
      %s24 = sphi 0, %s28
      %p25 = scmp.ge.s32.totalorder %s24, 4
      %s31 = sphi 0, %s43
      %s32 = sphi 0, %s39
      %s33 = sphi 0, %s31
      %s34 = sphi 0, %s32
      %s35 = sphi 0, %s33
      %s36 = sphi 0, %s34
      %s44 = sphi 0, %s44
      %s46 = sphi 0, %s44
      %s47 = sphi 0, %s46
      %s61 = sphi 0, %s47
      %s67 = sphi 0, %s69
      %s70 = sphi 0, %s67
      %s71 = sphi 0, %s70
      %s87 = sphi 0, %s71
      %s95 = sphi 0, %s97
      %s98 = sphi 0, %s95
      %s99 = sphi 0, %s98
      %s115 = sphi 0, %s99
    $region4: #{tpu_custom_call.1} parent=1 // loop_header_branch
      %27 = sbr.rel (%p25) target = $region8
    $region5: #{tpu_custom_call.1} parent=1 // loop_body
      %s29 = ssub.s32 %s24, 1
      %s30 = ssub.s32 %s24, 2
      %s37 = sadd.s32 1, %s32
      %p38 = scmp.ge.s32.totalorder %s37, 2
      %s39 = scalar_select %p38, 0, %s37
      %s40 = sadd.s32 1, %s31
      %s41 = scalar_select %p38, %s40, %s31
      %p42 = scmp.ge.s32.totalorder %s41, 1
      %s43 = scalar_select %p42, 0, %s41
      %s45 = sadd.s32 %s44, 1
      %p48 = scmp.eq.s32.totalorder %s24, 1
      %p49 = scmp.ne.s32.totalorder %s44, %s46
      %p50 = scmp.eq.s32.totalorder %s24, 0
      %p51 = por %p49, %p50
      %p52 = scmp.ne.s32.totalorder %s44, %s46
      %p53 = scmp.eq.s32.totalorder %s29, 1
      %p54 = por %p52, %p53
      %p55 = scmp.ne.s32.totalorder %s46, %s47
      %p56 = scmp.eq.s32.totalorder %s29, 0
      %p57 = por %p55, %p56
      %p58 = scmp.ne.s32.totalorder %s46, %s47
      %p59 = scmp.eq.s32.totalorder %s30, 1
      %p60 = por %p58, %p59
      %p62 = scmp.ne.s32.totalorder %s47, %s61
      %p63 = scmp.eq.s32.totalorder %s30, 0
      %p64 = por %p62, %p63
      %s65 = ssub.s32 %s31, %s43
      %p66 = scmp.eq.s32.totalorder %s65, 0
      %s68 = sadd.s32 %s67, 1
      %s69 = scalar_select %p66, %s67, %s68
      %p72 = pneg %p66
      %p73 = scmp.eq.s32.totalorder %s24, 1
      %p74 = por %p72, %p73
      %p75 = scmp.ne.s32.totalorder %s67, %s70
      %p76 = scmp.eq.s32.totalorder %s24, 0
      %p77 = por %p75, %p76
      %p78 = scmp.ne.s32.totalorder %s67, %s70
      %p79 = scmp.eq.s32.totalorder %s29, 1
      %p80 = por %p78, %p79
      %p81 = scmp.ne.s32.totalorder %s70, %s71
      %p82 = scmp.eq.s32.totalorder %s29, 0
      %p83 = por %p81, %p82
      %p84 = scmp.ne.s32.totalorder %s70, %s71
      %p85 = scmp.eq.s32.totalorder %s30, 1
      %p86 = por %p84, %p85
      %p88 = scmp.ne.s32.totalorder %s71, %s87
      %p89 = scmp.eq.s32.totalorder %s30, 0
      %p90 = por %p88, %p89
      %s91 = ssub.s32 %s32, %s39
      %s92 = ssub.s32 %s31, %s43
      %s93 = sor.u32 %s91, %s92
      %p94 = scmp.eq.s32.totalorder %s93, 0
      %s96 = sadd.s32 %s95, 1
      %s97 = scalar_select %p94, %s95, %s96
      %p100 = pneg %p94
      %p101 = scmp.eq.s32.totalorder %s24, 1
      %p102 = por %p100, %p101
      %p103 = scmp.ne.s32.totalorder %s95, %s98
      %p104 = scmp.eq.s32.totalorder %s24, 0
      %p105 = por %p103, %p104
      %p106 = scmp.ne.s32.totalorder %s95, %s98
      %p107 = scmp.eq.s32.totalorder %s29, 1
      %p108 = por %p106, %p107
      %p109 = scmp.ne.s32.totalorder %s98, %s99
      %p110 = scmp.eq.s32.totalorder %s29, 0
      %p111 = por %p109, %p110
      %p112 = scmp.ne.s32.totalorder %s98, %s99
      %p113 = scmp.eq.s32.totalorder %s30, 1
      %p114 = por %p112, %p113
      %p116 = scmp.ne.s32.totalorder %s99, %s115
      %p117 = scmp.eq.s32.totalorder %s30, 0
      %p118 = por %p116, %p117
      %p119 = scmp.le.s32.totalorder 1, %s24
      %p120 = scmp.lt.s32.totalorder %s24, 3
      %p121 = pnand %p119, %p120
      %p122 = pneg %p121
      // Predicated region
      $region9: #{tpu_custom_call.1} parent=5 // pred_check
        _
      $region10: #{tpu_custom_call.1} parent=5 // pred_check_branch
        %124 = sbr.rel (%p121) target = $region12
      $region11: #{tpu_custom_call.1} parent=5 // pred_region
        %s125 = ssub.s32 %s24, 1
        // Predicated region
        $region13: #{tpu_custom_call.1} parent=11 // pred_check
          %p126 = pneg %p57
        $region14: #{tpu_custom_call.1} parent=11 // pred_check_branch
          %128 = sbr.rel (%p126) target = $region16
        $region15: #{tpu_custom_call.1} parent=11 // pred_region
          %130 = vsyncadd [#allocation7], 0
          %s131 = sshll.u32 %s2, 4
          %s132 = int_to_ptr.hbm [resolvable:$true] %s131
          %s133 = sshll.u32 [#allocation6], 4
          %s134 = int_to_ptr.vmem [resolvable:$true] %s133
          %139 = dma.hbm_to_vmem [thread:$0]  %s132, 1024, %s134, [#allocation7], 128, 128, 8
        $region16: #{tpu_custom_call.1} parent=11 // pred_fallthru
          _
        // Predicated region
        $region17: #{tpu_custom_call.1} parent=11 // pred_check
          %p140 = pneg %p83
        $region18: #{tpu_custom_call.1} parent=11 // pred_check_branch
          %142 = sbr.rel (%p140) target = $region20
        $region19: #{tpu_custom_call.1} parent=11 // pred_region
          %144 = vsyncadd [#allocation10], 0
          %s145 = smul.addr %s33, 8
          %s146 = scalar_lea.hbm %s3, %s145
          %s148 = sshll.u32 %s146, 4
          %s149 = int_to_ptr.hbm [resolvable:$true] %s148
          %s150 = sshll.u32 [#allocation9], 4
          %s151 = int_to_ptr.vmem [resolvable:$true] %s150
          %153 = dma.hbm_to_vmem [thread:$0]  %s149, 128, %s151, [#allocation10]
        $region20: #{tpu_custom_call.1} parent=11 // pred_fallthru
          _
      $region12: #{tpu_custom_call.1} parent=5 // pred_fallthru
        _
      %p154 = scmp.lt.s32.totalorder %s24, 2
      // Predicated region
      $region21: #{tpu_custom_call.1} parent=5 // pred_check
        %p155 = pneg %p154
      $region22: #{tpu_custom_call.1} parent=5 // pred_check_branch
        %157 = sbr.rel (%p155) target = $region24
      $region23: #{tpu_custom_call.1} parent=5 // pred_region
        _
      $region24: #{tpu_custom_call.1} parent=5 // pred_fallthru
        _
      %p158 = scmp.le.s32.totalorder 1, %s24
      %p159 = scmp.lt.s32.totalorder %s24, 3
      %p160 = pnand %p158, %p159
      %p161 = pneg %p160
      // Predicated region
      $region25: #{tpu_custom_call.1} parent=5 // pred_check
        _
      $region26: #{tpu_custom_call.1} parent=5 // pred_check_branch
        %163 = sbr.rel (%p160) target = $region28
      $region27: #{tpu_custom_call.1} parent=5 // pred_region
        %s164 = ssub.s32 %s24, 1
        // Predicated region
        $region29: #{tpu_custom_call.1} parent=27 // pred_check
          %p165 = pneg %p57
        $region30: #{tpu_custom_call.1} parent=27 // pred_check_branch
          %167 = sbr.rel (%p165) target = $region32
        $region31: #{tpu_custom_call.1} parent=27 // pred_region
          %169 = dma.done [#allocation7], 1024
        $region32: #{tpu_custom_call.1} parent=27 // pred_fallthru
          _
        // Predicated region
        $region33: #{tpu_custom_call.1} parent=27 // pred_check
          %p170 = pneg %p83
        $region34: #{tpu_custom_call.1} parent=27 // pred_check_branch
          %172 = sbr.rel (%p170) target = $region36
        $region35: #{tpu_custom_call.1} parent=27 // pred_region
          %174 = dma.done [#allocation10], 128
        $region36: #{tpu_custom_call.1} parent=27 // pred_fallthru
          _
        %p175 = pneg %p57
        %p176 = pneg %p54
        %p177 = pneg %p83
        %p178 = pneg %p80
        %p179 = pneg %p111
        %p180 = pneg %p108
        %s181 = sand.u32 %s98, 1
        %s182 = scalar_lea.sflag [#allocation8], %s181
        %s183 = sand.u32 %s98, 1
        %s184 = smul.addr %s183, 8
        %s185 = scalar_lea.vmem [#allocation11], %s184
        %s186 = smul.u32 %s33, 8
        %s187 = sshra.s32 %s186, 7
        %s188 = sand.u32 %s186, 127
        %s189 = sadd.s32 %s187, %s34
        %s190 = smul.u32 %s189, 128
        %s191 = sshra.s32 %s186, 7
        %s192 = sand.u32 %s186, 127
        %s193 = sadd.s32 %s190, %s192
        %s194 = sld [smem:[#allocation4 + %s193]]
        %s195 = scalar_lea.vmem [#allocation6], %s194
        %v196 = vld [vmem:[%s195] sm:$0x1]
        %197 = vst [vmem:[#allocation2] sm:$0x1] %v196
        %s198 = sadd.s32 %s186, 1
        %s199 = sshra.s32 %s198, 7
        %s200 = sand.u32 %s198, 127
        %s201 = sadd.s32 %s199, %s34
        %s202 = smul.u32 %s201, 128
        %s203 = sshra.s32 %s198, 7
        %s204 = sand.u32 %s198, 127
        %s205 = sadd.s32 %s202, %s204
        %s206 = sld [smem:[#allocation4 + %s205]]
        %s207 = scalar_lea.vmem [#allocation6], %s206
        %v208 = vld [vmem:[%s207] sm:$0x1]
        %209 = vst [vmem:[#allocation2 + $0x1] sm:$0x1] %v208
        %s210 = sadd.s32 %s186, 2
        %s211 = sshra.s32 %s210, 7
        %s212 = sand.u32 %s210, 127
        %s213 = sadd.s32 %s211, %s34
        %s214 = smul.u32 %s213, 128
        %s215 = sshra.s32 %s210, 7
        %s216 = sand.u32 %s210, 127
        %s217 = sadd.s32 %s214, %s216
        %s218 = sld [smem:[#allocation4 + %s217]]
        %s219 = scalar_lea.vmem [#allocation6], %s218
        %v220 = vld [vmem:[%s219] sm:$0x1]
        %221 = vst [vmem:[#allocation2 + $0x2] sm:$0x1] %v220
        %s222 = sadd.s32 %s186, 3
        %s223 = sshra.s32 %s222, 7
        %s224 = sand.u32 %s222, 127
        %s225 = sadd.s32 %s223, %s34
        %s226 = smul.u32 %s225, 128
        %s227 = sshra.s32 %s222, 7
        %s228 = sand.u32 %s222, 127
        %s229 = sadd.s32 %s226, %s228
        %s230 = sld [smem:[#allocation4 + %s229]]
        %s231 = scalar_lea.vmem [#allocation6], %s230
        %v232 = vld [vmem:[%s231] sm:$0x1]
        %233 = vst [vmem:[#allocation2 + $0x3] sm:$0x1] %v232
        %s234 = sadd.s32 %s186, 4
        %s235 = sshra.s32 %s234, 7
        %s236 = sand.u32 %s234, 127
        %s237 = sadd.s32 %s235, %s34
        %s238 = smul.u32 %s237, 128
        %s239 = sshra.s32 %s234, 7
        %s240 = sand.u32 %s234, 127
        %s241 = sadd.s32 %s238, %s240
        %s242 = sld [smem:[#allocation4 + %s241]]
        %s243 = scalar_lea.vmem [#allocation6], %s242
        %v244 = vld [vmem:[%s243] sm:$0x1]
        %245 = vst [vmem:[#allocation2 + $0x4] sm:$0x1] %v244
        %s246 = sadd.s32 %s186, 5
        %s247 = sshra.s32 %s246, 7
        %s248 = sand.u32 %s246, 127
        %s249 = sadd.s32 %s247, %s34
        %s250 = smul.u32 %s249, 128
        %s251 = sshra.s32 %s246, 7
        %s252 = sand.u32 %s246, 127
        %s253 = sadd.s32 %s250, %s252
        %s254 = sld [smem:[#allocation4 + %s253]]
        %s255 = scalar_lea.vmem [#allocation6], %s254
        %v256 = vld [vmem:[%s255] sm:$0x1]
        %257 = vst [vmem:[#allocation2 + $0x5] sm:$0x1] %v256
        %s258 = sadd.s32 %s186, 6
        %s259 = sshra.s32 %s258, 7
        %s260 = sand.u32 %s258, 127
        %s261 = sadd.s32 %s259, %s34
        %s262 = smul.u32 %s261, 128
        %s263 = sshra.s32 %s258, 7
        %s264 = sand.u32 %s258, 127
        %s265 = sadd.s32 %s262, %s264
        %s266 = sld [smem:[#allocation4 + %s265]]
        %s267 = scalar_lea.vmem [#allocation6], %s266
        %v268 = vld [vmem:[%s267] sm:$0x1]
        %269 = vst [vmem:[#allocation2 + $0x6] sm:$0x1] %v268
        %s270 = sadd.s32 %s186, 7
        %s271 = sshra.s32 %s270, 7
        %s272 = sand.u32 %s270, 127
        %s273 = sadd.s32 %s271, %s34
        %s274 = smul.u32 %s273, 128
        %s275 = sshra.s32 %s270, 7
        %s276 = sand.u32 %s270, 127
        %s277 = sadd.s32 %s274, %s276
        %s278 = sld [smem:[#allocation4 + %s277]]
        %s279 = scalar_lea.vmem [#allocation6], %s278
        %v280 = vld [vmem:[%s279] sm:$0x1]
        %281 = vst [vmem:[#allocation2 + $0x7] sm:$0x1] %v280
        %v282 = vld [vmem:[#allocation2] sm:$0xff]
        %v283 = vld [vmem:[#allocation9] sm:$0xff]
        %v284 = vadd.f32 %v282, %v283
        %285 = vst [vmem:[%s185] sm:$0xff] %v284
        %s286 = sand.u32 %s98, 1
        %s287 = scalar_lea.sflag [#allocation8], %s286
        %s288 = sand.u32 %s98, 1
        %s289 = smul.addr %s288, 8
        %s290 = scalar_lea.vmem [#allocation11], %s289
        // Predicated region
        $region37: #{tpu_custom_call.1} parent=27 // pred_check
          %p291 = pneg %p108
        $region38: #{tpu_custom_call.1} parent=27 // pred_check_branch
          %293 = sbr.rel (%p291) target = $region40
        $region39: #{tpu_custom_call.1} parent=27 // pred_region
          %295 = vsyncadd %s287, 0
          %s296 = sadd.s32 %s33, %s34
          %s297 = smul.addr %s296, 8
          %s298 = scalar_lea.hbm %s4, %s297
          %s300 = sshll.u32 %s290, 4
          %s301 = int_to_ptr.vmem [resolvable:$true] %s300
          %s302 = sshll.u32 %s298, 4
          %s303 = int_to_ptr.hbm [resolvable:$true] %s302
          %305 = dma.vmem_to_hbm [thread:$0]  %s301, 128, %s303, %s287
        $region40: #{tpu_custom_call.1} parent=27 // pred_fallthru
          _
      $region28: #{tpu_custom_call.1} parent=5 // pred_fallthru
        _
      %p306 = scmp.le.s32.totalorder 2, %s24
      // Predicated region
      $region41: #{tpu_custom_call.1} parent=5 // pred_check
        %p307 = pneg %p306
      $region42: #{tpu_custom_call.1} parent=5 // pred_check_branch
        %309 = sbr.rel (%p307) target = $region44
      $region43: #{tpu_custom_call.1} parent=5 // pred_region
        %s310 = ssub.s32 %s24, 2
        // Predicated region
        $region45: #{tpu_custom_call.1} parent=43 // pred_check
          %p311 = pneg %p114
        $region46: #{tpu_custom_call.1} parent=43 // pred_check_branch
          %313 = sbr.rel (%p311) target = $region48
        $region47: #{tpu_custom_call.1} parent=43 // pred_region
          %s314 = sand.u32 %s99, 1
          %s315 = scalar_lea.sflag [#allocation8], %s314
          %s316 = sand.u32 %s99, 1
          %s317 = smul.addr %s316, 8
          %s318 = scalar_lea.vmem [#allocation11], %s317
          %320 = dma.done %s315, 128
        $region48: #{tpu_custom_call.1} parent=43 // pred_fallthru
          _
      $region44: #{tpu_custom_call.1} parent=5 // pred_fallthru
        _
    $region6: #{tpu_custom_call.1} parent=1 // loop_footer
      %s28 = sadd.s32 1, %s24
    $region7: #{tpu_custom_call.1} parent=1 // loop_footer_branch
      %23 = sbr.rel target = $region3
    $region8: #{tpu_custom_call.1} parent=1 // loop_exit
      _
    %321 = vsyncpa [#allocation7], 1
    %s322 = scalar_lea.sflag [#allocation7], 1
    %323 = vsyncpa %s322, 1
    %324 = vsyncpa [#allocation10], 1
    %325 = vsyncpa [#allocation8], 1
    %s326 = scalar_lea.sflag [#allocation8], 1
    %327 = vsyncpa %s326, 1

</llo_original>
